<compile_context>
chip_gen: v6e
topology: v6e:2x2x1
jax: 0.10.0
libtpu: 0.0.40
codegen_flags: <defaults>
</compile_context>

<pallas_src>
import functools

import jax
import jax.numpy as jnp
from jax.experimental import pallas as pl
from jax.experimental.pallas import tpu as pltpu


def _inv_pixel_shuffle_kernel(x_ref, s_ref, o_ref):
    """One (batch, channel, row-block) tile of invPixelShuffle.

    x_ref: (1, 1, TH, r*W)        TH output rows; each "super row" holds the r
                                  consecutive input rows it is built from,
                                  concatenated along the lane dimension.
    s_ref: (r, W, W//r)           column-selection matrices;
                                  s_ref[j][w, k] = 1 iff w == r*k + j.
    o_ref: (1, 1, r, r, TH, W//r)
    """
    r = o_ref.shape[2]
    wo = o_ref.shape[5]
    w = r * wo
    for i in range(r):                                   # input-row parity
        xi = x_ref[0, 0, :, i * w:(i + 1) * w]           # (TH, W), rows == i (mod r)
        for j in range(r):                               # input-column parity
            # Column de-interleave as one MXU matmul: (TH, W) @ (W, W//r).
            oij = jnp.dot(xi, s_ref[j], preferred_element_type=jnp.float32)
            o_ref[0, 0, i, j] = oij.astype(o_ref.dtype)


def _pick_row_block(ho, bytes_per_super_row, target_bytes=2 * 1024 * 1024):
    """Largest row block that divides `ho`, is a multiple of 8 (unless it is
    the full extent), and keeps the input tile under ~target_bytes."""
    max_rows = max(8, target_bytes // max(1, bytes_per_super_row))
    if ho <= max_rows:
        return ho
    th = (min(ho, max_rows) // 8) * 8
    while th >= 8:
        if ho % th == 0:
            return th
        th -= 8
    return ho  # fallback: whole extent


@functools.partial(jax.jit, static_argnames=("ratio",))
def inv_pixel_shuffle(x, ratio=2):
    """x: (N, C, H, W) -> (N, C*ratio*ratio, H//ratio, W//ratio), NCHW."""
    n, c, h, w = x.shape
    r = ratio
    assert h % r == 0 and w % r == 0, (h, w, r)
    ho, wo = h // r, w // r

    # Free (row-major) reshape: group the r input rows feeding each output row.
    x_rows = x.reshape(n, c, ho, r * w)

    # Constant column-selection matrices, (r, W, W//r): sel[j, w', k] = [w' == r*k + j].
    w_idx = jnp.arange(w, dtype=jnp.int32)[None, :, None]
    k_idx = jnp.arange(wo, dtype=jnp.int32)[None, None, :]
    j_idx = jnp.arange(r, dtype=jnp.int32)[:, None, None]
    sel = (w_idx == r * k_idx + j_idx).astype(x.dtype)

    th = _pick_row_block(ho, r * w * x.dtype.itemsize)
    grid = (n, c, ho // th)

    out6 = pl.pallas_call(
        _inv_pixel_shuffle_kernel,
        out_shape=jax.ShapeDtypeStruct((n, c, r, r, ho, wo), x.dtype),
        grid=grid,
        in_specs=[
            pl.BlockSpec((1, 1, th, r * w), lambda b, ci, hi: (b, ci, hi, 0)),
            pl.BlockSpec((r, w, wo), lambda b, ci, hi: (0, 0, 0)),
        ],
        out_specs=pl.BlockSpec((1, 1, r, r, th, wo),
                               lambda b, ci, hi: (b, ci, 0, 0, hi, 0)),
        compiler_params=pltpu.CompilerParams(
            dimension_semantics=("parallel", "parallel", "parallel")),
        cost_estimate=pl.CostEstimate(
            flops=2 * n * c * h * w * w,
            transcendentals=0,
            bytes_accessed=2 * x.size * x.dtype.itemsize),
    )(x_rows, sel)

    # Free (row-major) reshape: (c, i, j) channel grouping == torch ordering.
    return out6.reshape(n, c * r * r, ho, wo)


def _reference_inv_pixel_shuffle(x, ratio):
    """Pure-JAX reference matching the PyTorch module exactly."""
    n, c, h, w = x.shape
    t = x.reshape(n, c, h // ratio, ratio, w // ratio, ratio)
    t = jnp.transpose(t, (0, 1, 3, 5, 2, 4))
    return t.reshape(n, c * ratio * ratio, h // ratio, w // ratio)


if __name__ == "__main__":
    key = jax.random.PRNGKey(0)
    N, C, H, W = 2, 4, 16, 16
    ratio = 2

    x = jax.random.normal(key, (N, C, H, W), jnp.float32)

    out = inv_pixel_shuffle(x, ratio=ratio)
    out = jax.block_until_ready(out)

    assert out.shape == (N, C * ratio * ratio, H // ratio, W // ratio), out.shape

    ref = jax.block_until_ready(_reference_inv_pixel_shuffle(x, ratio))
    assert jnp.allclose(out, ref, atol=1e-6, rtol=1e-6), "mismatch vs reference"

    print("KERNEL_OK")
</pallas_src>

<mosaic_0001>
module attributes {stable_mosaic.version = 11 : i64} {
  func.func @_inv_pixel_shuffle_kernel(%arg0: i32, %arg1: i32, %arg2: i32, %arg3: memref<1x1x8x32xf32, #tpu.memory_space<vmem>>, %arg4: memref<2x16x8xf32, #tpu.memory_space<vmem>>, %arg5: memref<1x1x2x2x8x8xf32, #tpu.memory_space<vmem>>) attributes {dimension_semantics = [#tpu.dimension_semantics<parallel>, #tpu.dimension_semantics<parallel>, #tpu.dimension_semantics<parallel>], iteration_bounds = array<i64: 2, 4, 1>, scalar_prefetch = 0 : i64, scratch_operands = 0 : i64, tpu.core_type = #tpu.core_type<tc>, window_params = [{transform_indices = @transform_0, window_bounds = array<i64: 1, 1, 8, 32>}, {pipeline_mode = #tpu.pipeline_mode<synchronous>, transform_indices = @transform_1, window_bounds = array<i64: 2, 16, 8>}, {transform_indices = @transform_2, window_bounds = array<i64: 1, 1, 2, 2, 8, 8>}]} {
    %c0 = arith.constant 0 : index
    %c0_0 = arith.constant 0 : index
    %c0_1 = arith.constant 0 : index
    %c0_2 = arith.constant 0 : index
    %0 = vector.load %arg3[%c0, %c0_0, %c0_1, %c0_2] : memref<1x1x8x32xf32, #tpu.memory_space<vmem>>, vector<1x1x8x16xf32>
    %1 = vector.shape_cast %0 : vector<1x1x8x16xf32> to vector<8x16xf32>
    %c0_3 = arith.constant 0 : index
    %c0_4 = arith.constant 0 : index
    %c0_5 = arith.constant 0 : index
    %2 = vector.load %arg4[%c0_3, %c0_4, %c0_5] : memref<2x16x8xf32, #tpu.memory_space<vmem>>, vector<1x16x8xf32>
    %3 = vector.shape_cast %2 : vector<1x16x8xf32> to vector<16x8xf32>
    %cst = arith.constant dense<0.000000e+00> : vector<8x8xf32>
    %4 = tpu.matmul %1, %3, %cst {dimension_numbers = #tpu.dot_dimension_numbers<[1], [0], [0], [1], [0, 0, 1, 1], [], []>} : vector<8x16xf32>, vector<16x8xf32>, vector<8x8xf32> -> vector<8x8xf32>
    %c0_6 = arith.constant 0 : index
    %c0_7 = arith.constant 0 : index
    %c0_8 = arith.constant 0 : index
    %c0_9 = arith.constant 0 : index
    %c0_10 = arith.constant 0 : index
    %c0_11 = arith.constant 0 : index
    %5 = vector.load %arg5[%c0_6, %c0_7, %c0_8, %c0_9, %c0_10, %c0_11] : memref<1x1x2x2x8x8xf32, #tpu.memory_space<vmem>>, vector<1x1x1x1x8x8xf32>
    %6 = vector.shape_cast %5 : vector<1x1x1x1x8x8xf32> to vector<8x8xf32>
    %7 = vector.shape_cast %4 : vector<8x8xf32> to vector<1x1x1x1x8x8xf32>
    tpu.vector_store %arg5[%c0_6, %c0_7, %c0_8, %c0_9, %c0_10, %c0_11], %7 {strides = array<i32>} : memref<1x1x2x2x8x8xf32, #tpu.memory_space<vmem>>, vector<1x1x1x1x8x8xf32>,
    %c1 = arith.constant 1 : index
    %c0_12 = arith.constant 0 : index
    %c0_13 = arith.constant 0 : index
    %8 = vector.load %arg4[%c1, %c0_12, %c0_13] : memref<2x16x8xf32, #tpu.memory_space<vmem>>, vector<1x16x8xf32>
    %9 = vector.shape_cast %8 : vector<1x16x8xf32> to vector<16x8xf32>
    %cst_14 = arith.constant dense<0.000000e+00> : vector<8x8xf32>
    %10 = tpu.matmul %1, %9, %cst_14 {dimension_numbers = #tpu.dot_dimension_numbers<[1], [0], [0], [1], [0, 0, 1, 1], [], []>} : vector<8x16xf32>, vector<16x8xf32>, vector<8x8xf32> -> vector<8x8xf32>
    %c0_15 = arith.constant 0 : index
    %c0_16 = arith.constant 0 : index
    %c0_17 = arith.constant 0 : index
    %c1_18 = arith.constant 1 : index
    %c0_19 = arith.constant 0 : index
    %c0_20 = arith.constant 0 : index
    %11 = vector.load %arg5[%c0_15, %c0_16, %c0_17, %c1_18, %c0_19, %c0_20] : memref<1x1x2x2x8x8xf32, #tpu.memory_space<vmem>>, vector<1x1x1x1x8x8xf32>
    %12 = vector.shape_cast %11 : vector<1x1x1x1x8x8xf32> to vector<8x8xf32>
    %13 = vector.shape_cast %10 : vector<8x8xf32> to vector<1x1x1x1x8x8xf32>
    tpu.vector_store %arg5[%c0_15, %c0_16, %c0_17, %c1_18, %c0_19, %c0_20], %13 {strides = array<i32>} : memref<1x1x2x2x8x8xf32, #tpu.memory_space<vmem>>, vector<1x1x1x1x8x8xf32>,
    %c0_21 = arith.constant 0 : index
    %c0_22 = arith.constant 0 : index
    %c0_23 = arith.constant 0 : index
    %c16 = arith.constant 16 : index
    %14 = vector.load %arg3[%c0_21, %c0_22, %c0_23, %c16] : memref<1x1x8x32xf32, #tpu.memory_space<vmem>>, vector<1x1x8x16xf32>
    %15 = vector.shape_cast %14 : vector<1x1x8x16xf32> to vector<8x16xf32>
    %c0_24 = arith.constant 0 : index
    %c0_25 = arith.constant 0 : index
    %c0_26 = arith.constant 0 : index
    %16 = vector.load %arg4[%c0_24, %c0_25, %c0_26] : memref<2x16x8xf32, #tpu.memory_space<vmem>>, vector<1x16x8xf32>
    %17 = vector.shape_cast %16 : vector<1x16x8xf32> to vector<16x8xf32>
    %cst_27 = arith.constant dense<0.000000e+00> : vector<8x8xf32>
    %18 = tpu.matmul %15, %17, %cst_27 {dimension_numbers = #tpu.dot_dimension_numbers<[1], [0], [0], [1], [0, 0, 1, 1], [], []>} : vector<8x16xf32>, vector<16x8xf32>, vector<8x8xf32> -> vector<8x8xf32>
    %c0_28 = arith.constant 0 : index
    %c0_29 = arith.constant 0 : index
    %c1_30 = arith.constant 1 : index
    %c0_31 = arith.constant 0 : index
    %c0_32 = arith.constant 0 : index
    %c0_33 = arith.constant 0 : index
    %19 = vector.load %arg5[%c0_28, %c0_29, %c1_30, %c0_31, %c0_32, %c0_33] : memref<1x1x2x2x8x8xf32, #tpu.memory_space<vmem>>, vector<1x1x1x1x8x8xf32>
    %20 = vector.shape_cast %19 : vector<1x1x1x1x8x8xf32> to vector<8x8xf32>
    %21 = vector.shape_cast %18 : vector<8x8xf32> to vector<1x1x1x1x8x8xf32>
    tpu.vector_store %arg5[%c0_28, %c0_29, %c1_30, %c0_31, %c0_32, %c0_33], %21 {strides = array<i32>} : memref<1x1x2x2x8x8xf32, #tpu.memory_space<vmem>>, vector<1x1x1x1x8x8xf32>,
    %c1_34 = arith.constant 1 : index
    %c0_35 = arith.constant 0 : index
    %c0_36 = arith.constant 0 : index
    %22 = vector.load %arg4[%c1_34, %c0_35, %c0_36] : memref<2x16x8xf32, #tpu.memory_space<vmem>>, vector<1x16x8xf32>
    %23 = vector.shape_cast %22 : vector<1x16x8xf32> to vector<16x8xf32>
    %cst_37 = arith.constant dense<0.000000e+00> : vector<8x8xf32>
    %24 = tpu.matmul %15, %23, %cst_37 {dimension_numbers = #tpu.dot_dimension_numbers<[1], [0], [0], [1], [0, 0, 1, 1], [], []>} : vector<8x16xf32>, vector<16x8xf32>, vector<8x8xf32> -> vector<8x8xf32>
    %c0_38 = arith.constant 0 : index
    %c0_39 = arith.constant 0 : index
    %c1_40 = arith.constant 1 : index
    %c1_41 = arith.constant 1 : index
    %c0_42 = arith.constant 0 : index
    %c0_43 = arith.constant 0 : index
    %25 = vector.load %arg5[%c0_38, %c0_39, %c1_40, %c1_41, %c0_42, %c0_43] : memref<1x1x2x2x8x8xf32, #tpu.memory_space<vmem>>, vector<1x1x1x1x8x8xf32>
    %26 = vector.shape_cast %25 : vector<1x1x1x1x8x8xf32> to vector<8x8xf32>
    %27 = vector.shape_cast %24 : vector<8x8xf32> to vector<1x1x1x1x8x8xf32>
    tpu.vector_store %arg5[%c0_38, %c0_39, %c1_40, %c1_41, %c0_42, %c0_43], %27 {strides = array<i32>} : memref<1x1x2x2x8x8xf32, #tpu.memory_space<vmem>>, vector<1x1x1x1x8x8xf32>,
    return
  }
  func.func @transform_0(%arg0: i32, %arg1: i32, %arg2: i32) -> (i32, i32, i32, i32) {
    %c0_i32 = arith.constant 0 : i32
    %c0_i32_0 = arith.constant 0 : i32
    return %arg0, %arg1, %arg2, %c0_i32 : i32, i32, i32, i32
  }
  func.func @transform_1(%arg0: i32, %arg1: i32, %arg2: i32) -> (i32, i32, i32) {
    %c0_i32 = arith.constant 0 : i32
    %c0_i32_0 = arith.constant 0 : i32
    %c0_i32_1 = arith.constant 0 : i32
    %c0_i32_2 = arith.constant 0 : i32
    return %c0_i32, %c0_i32_0, %c0_i32_1 : i32, i32, i32
  }
  func.func @transform_2(%arg0: i32, %arg1: i32, %arg2: i32) -> (i32, i32, i32, i32, i32, i32) {
    %c0_i32 = arith.constant 0 : i32
    %c0_i32_0 = arith.constant 0 : i32
    %c0_i32_1 = arith.constant 0 : i32
    %c0_i32_2 = arith.constant 0 : i32
    return %arg0, %arg1, %c0_i32, %c0_i32_0, %arg2, %c0_i32_1 : i32, i32, i32, i32, i32, i32
  }
}

</mosaic_0001>

<llo_original>
// kernel: inv_pixel_shuffle.1
$region0: #{inv_pixel_shuffle.1}
  #allocation0 [shape = 'u32[]', space=smem, size = 0x4, offset = 0x4, fixed_abs, tag = 'smem constant byte address 0x4 - core index']
  #allocation1 [shape = 'u32[144,128]{1,0:T(1,128)}', space=vmem, size = 0x12000, scoped, tag = 'internal scratch']
  %s0 = inlined_call_operand.vmem [shape: f32[2,4,8,32], index: 0, kind: input, shape index: {}]
  %s1 = inlined_call_operand.vmem [shape: f32[2,16,8], index: 1, kind: input, shape index: {}]
  %s2 = inlined_call_operand.vmem [shape: f32[2,4,2,2,8,8], index: 2, kind: output, shape index: {}]
  %s3 = sld [smem:[#allocation0]]
  $region41: #{inv_pixel_shuffle.1} parent=0
    _
  %s5 = ssub.s32 1, %s3
  %s6 = scalar_select 0, %s5, %s3
  loop: start=0, step=1, limit=10
  $region2: #{inv_pixel_shuffle.1} parent=0 // loop_pre_header
    _
  $region3: #{inv_pixel_shuffle.1} parent=0 // loop_header
    %s8 = sphi 0, %s12
    %p9 = scmp.ge.s32.totalorder %s8, 10
    %s15 = sphi 0, %s34
    %s16 = sphi 0, %s30
    %s17 = sphi 0, %s26
    %s18 = sphi 0, %s15
    %s19 = sphi 0, %s16
    %s20 = sphi 0, %s17
    %s21 = sphi 0, %s18
    %s22 = sphi 0, %s19
    %s23 = sphi 0, %s20
    %s41 = sphi 0, %s43
    %s44 = sphi 0, %s41
    %s45 = sphi 0, %s44
    %s61 = sphi 0, %s45
    %s65 = sphi 0, %s65
    %s67 = sphi 0, %s65
    %s68 = sphi 0, %s67
    %s82 = sphi 0, %s68
    %s92 = sphi 0, %s94
    %s95 = sphi 0, %s92
    %s96 = sphi 0, %s95
    %s112 = sphi 0, %s96
  $region4: #{inv_pixel_shuffle.1} parent=0 // loop_header_branch
    %11 = sbr.rel (%p9) target = $region8
  $region5: #{inv_pixel_shuffle.1} parent=0 // loop_body
    %s13 = ssub.s32 %s8, 1
    %s14 = ssub.s32 %s8, 2
    %s24 = sadd.s32 1, %s17
    %p25 = scmp.ge.s32.totalorder %s24, 1
    %s26 = scalar_select %p25, 0, %s24
    %s27 = sadd.s32 1, %s16
    %s28 = scalar_select %p25, %s27, %s16
    %p29 = scmp.ge.s32.totalorder %s28, 4
    %s30 = scalar_select %p29, 0, %s28
    %s31 = sadd.s32 1, %s15
    %s32 = scalar_select %p29, %s31, %s15
    %p33 = scmp.ge.s32.totalorder %s32, 2
    %s34 = scalar_select %p33, 0, %s32
    %s35 = ssub.s32 %s15, %s34
    %s36 = ssub.s32 %s16, %s30
    %s37 = sor.u32 %s35, %s36
    %s38 = ssub.s32 %s17, %s26
    %s39 = sor.u32 %s37, %s38
    %p40 = scmp.eq.s32.totalorder %s39, 0
    %s42 = sadd.s32 %s41, 1
    %s43 = scalar_select %p40, %s41, %s42
    %p46 = pneg %p40
    %p47 = scmp.eq.s32.totalorder %s8, 7
    %p48 = por %p46, %p47
    %p49 = scmp.ne.s32.totalorder %s41, %s44
    %p50 = scmp.eq.s32.totalorder %s8, 0
    %p51 = por %p49, %p50
    %p52 = scmp.ne.s32.totalorder %s41, %s44
    %p53 = scmp.eq.s32.totalorder %s13, 7
    %p54 = por %p52, %p53
    %p55 = scmp.ne.s32.totalorder %s44, %s45
    %p56 = scmp.eq.s32.totalorder %s13, 0
    %p57 = por %p55, %p56
    %p58 = scmp.ne.s32.totalorder %s44, %s45
    %p59 = scmp.eq.s32.totalorder %s14, 7
    %p60 = por %p58, %p59
    %p62 = scmp.ne.s32.totalorder %s45, %s61
    %p63 = scmp.eq.s32.totalorder %s14, 0
    %p64 = por %p62, %p63
    %s66 = sadd.s32 %s65, 1
    %p69 = scmp.eq.s32.totalorder %s8, 7
    %p70 = scmp.ne.s32.totalorder %s65, %s67
    %p71 = scmp.eq.s32.totalorder %s8, 0
    %p72 = por %p70, %p71
    %p73 = scmp.ne.s32.totalorder %s65, %s67
    %p74 = scmp.eq.s32.totalorder %s13, 7
    %p75 = por %p73, %p74
    %p76 = scmp.ne.s32.totalorder %s67, %s68
    %p77 = scmp.eq.s32.totalorder %s13, 0
    %p78 = por %p76, %p77
    %p79 = scmp.ne.s32.totalorder %s67, %s68
    %p80 = scmp.eq.s32.totalorder %s14, 7
    %p81 = por %p79, %p80
    %p83 = scmp.ne.s32.totalorder %s68, %s82
    %p84 = scmp.eq.s32.totalorder %s14, 0
    %p85 = por %p83, %p84
    %s86 = ssub.s32 %s15, %s34
    %s87 = ssub.s32 %s16, %s30
    %s88 = sor.u32 %s86, %s87
    %s89 = ssub.s32 %s17, %s26
    %s90 = sor.u32 %s88, %s89
    %p91 = scmp.eq.s32.totalorder %s90, 0
    %s93 = sadd.s32 %s92, 1
    %s94 = scalar_select %p91, %s92, %s93
    %p97 = pneg %p91
    %p98 = scmp.eq.s32.totalorder %s8, 7
    %p99 = por %p97, %p98
    %p100 = scmp.ne.s32.totalorder %s92, %s95
    %p101 = scmp.eq.s32.totalorder %s8, 0
    %p102 = por %p100, %p101
    %p103 = scmp.ne.s32.totalorder %s92, %s95
    %p104 = scmp.eq.s32.totalorder %s13, 7
    %p105 = por %p103, %p104
    %p106 = scmp.ne.s32.totalorder %s95, %s96
    %p107 = scmp.eq.s32.totalorder %s13, 0
    %p108 = por %p106, %p107
    %p109 = scmp.ne.s32.totalorder %s95, %s96
    %p110 = scmp.eq.s32.totalorder %s14, 7
    %p111 = por %p109, %p110
    %p113 = scmp.ne.s32.totalorder %s96, %s112
    %p114 = scmp.eq.s32.totalorder %s14, 0
    %p115 = por %p113, %p114
    %p116 = scmp.le.s32.totalorder 1, %s8
    %p117 = scmp.lt.s32.totalorder %s8, 9
    %p118 = pnand %p116, %p117
    %p119 = pneg %p118
    // Predicated region
    $region9: #{inv_pixel_shuffle.1} parent=5 // pred_check
      _
    $region10: #{inv_pixel_shuffle.1} parent=5 // pred_check_branch
      %121 = sbr.rel (%p118) target = $region12
    $region11: #{inv_pixel_shuffle.1} parent=5 // pred_region
      %s122 = ssub.s32 %s8, 1
      // Predicated region
      $region13: #{inv_pixel_shuffle.1} parent=11 // pred_check
        %p123 = pneg %p78
      $region14: #{inv_pixel_shuffle.1} parent=11 // pred_check_branch
        %125 = sbr.rel (%p123) target = $region16
      $region15: #{inv_pixel_shuffle.1} parent=11 // pred_region
        _
      $region16: #{inv_pixel_shuffle.1} parent=11 // pred_fallthru
        _
    $region12: #{inv_pixel_shuffle.1} parent=5 // pred_fallthru
      _
    %p126 = scmp.lt.s32.totalorder %s8, 8
    // Predicated region
    $region17: #{inv_pixel_shuffle.1} parent=5 // pred_check
      %p127 = pneg %p126
    $region18: #{inv_pixel_shuffle.1} parent=5 // pred_check_branch
      %129 = sbr.rel (%p127) target = $region20
    $region19: #{inv_pixel_shuffle.1} parent=5 // pred_region
      // Predicated region
      $region21: #{inv_pixel_shuffle.1} parent=19 // pred_check
        %p130 = pneg %p51
      $region22: #{inv_pixel_shuffle.1} parent=19 // pred_check_branch
        %132 = sbr.rel (%p130) target = $region24
      $region23: #{inv_pixel_shuffle.1} parent=19 // pred_region
        %p133 = scmp.lt.s32.totalorder %s15, 1
        %s134 = scalar_select %p133, %s15, 1
        %p135 = scmp.lt.s32.totalorder %s16, 3
        %s136 = scalar_select %p135, %s16, 3
        %p137 = scmp.lt.s32.totalorder %s17, 0
        %s138 = scalar_select %p137, %s17, 0
        %s139 = sadd.s32 %s138, %s136
        %s140 = smul.addr %s134, 4
        %s141 = sadd.s32 %s139, %s140
        %s142 = smul.addr %s141, 8
        %s143 = scalar_lea.vmem %s0, %s142
      $region24: #{inv_pixel_shuffle.1} parent=19 // pred_fallthru
        _
    $region20: #{inv_pixel_shuffle.1} parent=5 // pred_fallthru
      _
    %p144 = scmp.le.s32.totalorder 1, %s8
    %p145 = scmp.lt.s32.totalorder %s8, 9
    %p146 = pnand %p144, %p145
    %p147 = pneg %p146
    // Predicated region
    $region25: #{inv_pixel_shuffle.1} parent=5 // pred_check
      _
    $region26: #{inv_pixel_shuffle.1} parent=5 // pred_check_branch
      %149 = sbr.rel (%p146) target = $region28
    $region27: #{inv_pixel_shuffle.1} parent=5 // pred_region
      %s150 = ssub.s32 %s8, 1
      %p151 = scmp.lt.s32.totalorder %s18, 1
      %s152 = scalar_select %p151, %s18, 1
      %p153 = scmp.lt.s32.totalorder %s19, 3
      %s154 = scalar_select %p153, %s19, 3
      %p155 = scmp.lt.s32.totalorder %s20, 0
      %s156 = scalar_select %p155, %s20, 0
      %s157 = sadd.s32 %s156, %s154
      %s158 = smul.addr %s152, 4
      %s159 = sadd.s32 %s157, %s158
      %s160 = smul.addr %s159, 8
      %s161 = scalar_lea.vmem %s0, %s160
      %p162 = pneg %p57
      %p163 = pneg %p54
      %p164 = pneg %p78
      %p165 = pneg %p75
      %p166 = pneg %p108
      %p167 = pneg %p105
      %p168 = scmp.lt.s32.totalorder %s18, 1
      %s169 = scalar_select %p168, %s18, 1
      %p170 = scmp.lt.s32.totalorder %s19, 3
      %s171 = scalar_select %p170, %s19, 3
      %p172 = scmp.lt.s32.totalorder %s20, 0
      %s173 = scalar_select %p172, %s20, 0
      %s174 = smul.addr %s171, 4
      %s175 = sadd.s32 %s173, %s174
      %s176 = smul.addr %s169, 16
      %s177 = sadd.s32 %s175, %s176
      %s178 = smul.addr %s177, 8
      %s179 = scalar_lea.vmem %s2, %s178
      %p180 = scmp.lt.s32.totalorder %s18, 1
      %s181 = scalar_select %p180, %s18, 1
      %p182 = scmp.lt.s32.totalorder %s19, 3
      %s183 = scalar_select %p182, %s19, 3
      %p184 = scmp.lt.s32.totalorder %s20, 0
      %s185 = scalar_select %p184, %s20, 0
      %s186 = sadd.s32 %s185, %s183
      %s187 = smul.addr %s181, 4
      %s188 = sadd.s32 %s186, %s187
      %s189 = smul.addr %s188, 8
      %s190 = scalar_lea.vmem %s0, %s189
      %p191 = scmp.lt.s32.totalorder %s18, 1
      %s192 = scalar_select %p191, %s18, 1
      %p193 = scmp.lt.s32.totalorder %s19, 3
      %s194 = scalar_select %p193, %s19, 3
      %p195 = scmp.lt.s32.totalorder %s20, 0
      %s196 = scalar_select %p195, %s20, 0
      %s197 = smul.addr %s194, 4
      %s198 = sadd.s32 %s196, %s197
      %s199 = smul.addr %s192, 16
      %s200 = sadd.s32 %s198, %s199
      %s201 = smul.addr %s200, 8
      %s202 = scalar_lea.vmem %s2, %s201
      %v203 = vld [vmem:[%s190] sm:$0xff]
      %v204 = vld [vmem:[%s1] sm:$0xff]
      %v205 = vld [vmem:[%s1 + $0x8] sm:$0xff]
      %vm206 = vcmask 130048
      %v208 = vsel %vm206, %v203, 0
      %210 = vmatprep.subr.mxu0 0.0
      %211 = vmatpush1.msra.mxu0 0.0
      %212 = vmatprep.subr.mxu0 0.0
      %213 = vmatpush1.msra.mxu0 0.0
      %214 = vmatprep.subr.mxu0 0.0
      %215 = vmatpush1.msra.mxu0 0.0
      %216 = vmatprep.subr.mxu0 0.0
      %217 = vmatpush1.msra.mxu0 0.0
      %218 = vmatprep.subr.mxu0 0.0
      %219 = vmatpush1.msra.mxu0 0.0
      %220 = vmatprep.subr.mxu0 0.0
      %221 = vmatpush1.msra.mxu0 0.0
      %222 = vmatprep.subr.mxu0 0.0
      %223 = vmatpush1.msra.mxu0 0.0
      %224 = vmatprep.subr.mxu0 0.0
      %225 = vmatpush1.msra.mxu0 0.0
      %226 = vmatprep.subr.mxu0 0.0
      %227 = vmatpush1.msra.mxu0 0.0
      %228 = vmatprep.subr.mxu0 0.0
      %229 = vmatpush1.msra.mxu0 0.0
      %230 = vmatprep.subr.mxu0 0.0
      %231 = vmatpush1.msra.mxu0 0.0
      %232 = vmatprep.subr.mxu0 0.0
      %233 = vmatpush1.msra.mxu0 0.0
      %234 = vmatprep.subr.mxu0 0.0
      %235 = vmatpush1.msra.mxu0 0.0
      %236 = vmatprep.subr.mxu0 0.0
      %237 = vmatpush1.msra.mxu0 0.0
      %238 = vmatprep.subr.mxu0 0.0
      %239 = vmatpush1.msra.mxu0 %v205
      %240 = vmatprep.subr.mxu0 0.0
      %241 = vmatpush1.msra.mxu0 %v204
      %242 = vmatprep.subr.mxu0 0.0
      %243 = vmatpush2.msra.mxu0 0.0
      %244 = vmatprep.subr.mxu0 0.0
      %245 = vmatpush2.msra.mxu0 0.0
      %246 = vmatprep.subr.mxu0 0.0
      %247 = vmatpush2.msra.mxu0 0.0
      %248 = vmatprep.subr.mxu0 0.0
      %249 = vmatpush2.msra.mxu0 0.0
      %250 = vmatprep.subr.mxu0 0.0
      %251 = vmatpush2.msra.mxu0 0.0
      %252 = vmatprep.subr.mxu0 0.0
      %253 = vmatpush2.msra.mxu0 0.0
      %254 = vmatprep.subr.mxu0 0.0
      %255 = vmatpush2.msra.mxu0 0.0
      %256 = vmatprep.subr.mxu0 0.0
      %257 = vmatpush2.msra.mxu0 0.0
      %258 = vmatprep.subr.mxu0 0.0
      %259 = vmatpush2.msra.mxu0 0.0
      %260 = vmatprep.subr.mxu0 0.0
      %261 = vmatpush2.msra.mxu0 0.0
      %262 = vmatprep.subr.mxu0 0.0
      %263 = vmatpush2.msra.mxu0 0.0
      %264 = vmatprep.subr.mxu0 0.0
      %265 = vmatpush2.msra.mxu0 0.0
      %266 = vmatprep.subr.mxu0 0.0
      %267 = vmatpush2.msra.mxu0 0.0
      %268 = vmatprep.subr.mxu0 0.0
      %269 = vmatpush2.msra.mxu0 0.0
      %270 = vmatprep.subr.mxu0 0.0
      %271 = vmatpush2.msra.mxu0 0.0
      %272 = vmatprep.subr.mxu0 0.0
      %273 = vmatpush2.msra.mxu0 0.0
      %274 = vmatprep.mubr.f32.mxu0 0.0
      %275 = vmatmul.mubr.f32.gmra.mxu0 %v208
      %v276 = vpop.f32.mrf.mxu0
      %v277 = vadd.f32 0.0, %v276
      %v278 = vpop.f32.mrf.mxu0
      %279 = vdwg.mxu0
      %vm280 = vcmask 64512
      %281 = vst.msk [vmem:[%s202] sm:$0xff] %vm280, %v277
      %s282 = scalar_lea.vmem %s1, 16
      %v283 = vld [vmem:[%s282] sm:$0xff]
      %v284 = vld [vmem:[%s282 + $0x8] sm:$0xff]
      %285 = vmatprep.subr.mxu0 0.0
      %286 = vmatpush1.msra.mxu0 0.0
      %287 = vmatprep.subr.mxu0 0.0
      %288 = vmatpush1.msra.mxu0 0.0
      %289 = vmatprep.subr.mxu0 0.0
      %290 = vmatpush1.msra.mxu0 0.0
      %291 = vmatprep.subr.mxu0 0.0
      %292 = vmatpush1.msra.mxu0 0.0
      %293 = vmatprep.subr.mxu0 0.0
      %294 = vmatpush1.msra.mxu0 0.0
      %295 = vmatprep.subr.mxu0 0.0
      %296 = vmatpush1.msra.mxu0 0.0
      %297 = vmatprep.subr.mxu0 0.0
      %298 = vmatpush1.msra.mxu0 0.0
      %299 = vmatprep.subr.mxu0 0.0
      %300 = vmatpush1.msra.mxu0 0.0
      %301 = vmatprep.subr.mxu0 0.0
      %302 = vmatpush1.msra.mxu0 0.0
      %303 = vmatprep.subr.mxu0 0.0
      %304 = vmatpush1.msra.mxu0 0.0
      %305 = vmatprep.subr.mxu0 0.0
      %306 = vmatpush1.msra.mxu0 0.0
      %307 = vmatprep.subr.mxu0 0.0
      %308 = vmatpush1.msra.mxu0 0.0
      %309 = vmatprep.subr.mxu0 0.0
      %310 = vmatpush1.msra.mxu0 0.0
      %311 = vmatprep.subr.mxu0 0.0
      %312 = vmatpush1.msra.mxu0 0.0
      %313 = vmatprep.subr.mxu0 0.0
      %314 = vmatpush1.msra.mxu0 %v284
      %315 = vmatprep.subr.mxu0 0.0
      %316 = vmatpush1.msra.mxu0 %v283
      %317 = vmatprep.subr.mxu0 0.0
      %318 = vmatpush2.msra.mxu0 0.0
      %319 = vmatprep.subr.mxu0 0.0
      %320 = vmatpush2.msra.mxu0 0.0
      %321 = vmatprep.subr.mxu0 0.0
      %322 = vmatpush2.msra.mxu0 0.0
      %323 = vmatprep.subr.mxu0 0.0
      %324 = vmatpush2.msra.mxu0 0.0
      %325 = vmatprep.subr.mxu0 0.0
      %326 = vmatpush2.msra.mxu0 0.0
      %327 = vmatprep.subr.mxu0 0.0
      %328 = vmatpush2.msra.mxu0 0.0
      %329 = vmatprep.subr.mxu0 0.0
      %330 = vmatpush2.msra.mxu0 0.0
      %331 = vmatprep.subr.mxu0 0.0
      %332 = vmatpush2.msra.mxu0 0.0
      %333 = vmatprep.subr.mxu0 0.0
      %334 = vmatpush2.msra.mxu0 0.0
      %335 = vmatprep.subr.mxu0 0.0
      %336 = vmatpush2.msra.mxu0 0.0
      %337 = vmatprep.subr.mxu0 0.0
      %338 = vmatpush2.msra.mxu0 0.0
      %339 = vmatprep.subr.mxu0 0.0
      %340 = vmatpush2.msra.mxu0 0.0
      %341 = vmatprep.subr.mxu0 0.0
      %342 = vmatpush2.msra.mxu0 0.0
      %343 = vmatprep.subr.mxu0 0.0
      %344 = vmatpush2.msra.mxu0 0.0
      %345 = vmatprep.subr.mxu0 0.0
      %346 = vmatpush2.msra.mxu0 0.0
      %347 = vmatprep.subr.mxu0 0.0
      %348 = vmatpush2.msra.mxu0 0.0
      %349 = vmatprep.mubr.f32.mxu0 0.0
      %350 = vmatmul.mubr.f32.gmra.mxu0 %v208
      %v351 = vpop.f32.mrf.mxu0
      %v352 = vadd.f32 0.0, %v351
      %v353 = vpop.f32.mrf.mxu0
      %354 = vdwg.mxu0
      %s355 = scalar_lea.vmem %s202, 8
      %356 = vst.msk [vmem:[%s355] sm:$0xff] %vm280, %v352
      %v357 = vld [vmem:[%s190] sm:$0xff]
      %v358 = vld [vmem:[%s1] sm:$0xff]
      %v359 = vld [vmem:[%s1 + $0x8] sm:$0xff]
      %361 = vrot.lane.b32.xlu0 %v357, 112
      %v362 = vpop.permute.xlu0 %361
      %v363 = vsel %vm206, %v362, 0
      %365 = vmatprep.subr.mxu0 0.0
      %366 = vmatpush1.msra.mxu0 0.0
      %367 = vmatprep.subr.mxu0 0.0
      %368 = vmatpush1.msra.mxu0 0.0
      %369 = vmatprep.subr.mxu0 0.0
      %370 = vmatpush1.msra.mxu0 0.0
      %371 = vmatprep.subr.mxu0 0.0
      %372 = vmatpush1.msra.mxu0 0.0
      %373 = vmatprep.subr.mxu0 0.0
      %374 = vmatpush1.msra.mxu0 0.0
      %375 = vmatprep.subr.mxu0 0.0
      %376 = vmatpush1.msra.mxu0 0.0
      %377 = vmatprep.subr.mxu0 0.0
      %378 = vmatpush1.msra.mxu0 0.0
      %379 = vmatprep.subr.mxu0 0.0
      %380 = vmatpush1.msra.mxu0 0.0
      %381 = vmatprep.subr.mxu0 0.0
      %382 = vmatpush1.msra.mxu0 0.0
      %383 = vmatprep.subr.mxu0 0.0
      %384 = vmatpush1.msra.mxu0 0.0
      %385 = vmatprep.subr.mxu0 0.0
      %386 = vmatpush1.msra.mxu0 0.0
      %387 = vmatprep.subr.mxu0 0.0
      %388 = vmatpush1.msra.mxu0 0.0
      %389 = vmatprep.subr.mxu0 0.0
      %390 = vmatpush1.msra.mxu0 0.0
      %391 = vmatprep.subr.mxu0 0.0
      %392 = vmatpush1.msra.mxu0 0.0
      %393 = vmatprep.subr.mxu0 0.0
      %394 = vmatpush1.msra.mxu0 %v359
      %395 = vmatprep.subr.mxu0 0.0
      %396 = vmatpush1.msra.mxu0 %v358
      %397 = vmatprep.subr.mxu0 0.0
      %398 = vmatpush2.msra.mxu0 0.0
      %399 = vmatprep.subr.mxu0 0.0
      %400 = vmatpush2.msra.mxu0 0.0
      %401 = vmatprep.subr.mxu0 0.0
      %402 = vmatpush2.msra.mxu0 0.0
      %403 = vmatprep.subr.mxu0 0.0
      %404 = vmatpush2.msra.mxu0 0.0
      %405 = vmatprep.subr.mxu0 0.0
      %406 = vmatpush2.msra.mxu0 0.0
      %407 = vmatprep.subr.mxu0 0.0
      %408 = vmatpush2.msra.mxu0 0.0
      %409 = vmatprep.subr.mxu0 0.0
      %410 = vmatpush2.msra.mxu0 0.0
      %411 = vmatprep.subr.mxu0 0.0
      %412 = vmatpush2.msra.mxu0 0.0
      %413 = vmatprep.subr.mxu0 0.0
      %414 = vmatpush2.msra.mxu0 0.0
      %415 = vmatprep.subr.mxu0 0.0
      %416 = vmatpush2.msra.mxu0 0.0
      %417 = vmatprep.subr.mxu0 0.0
      %418 = vmatpush2.msra.mxu0 0.0
      %419 = vmatprep.subr.mxu0 0.0
      %420 = vmatpush2.msra.mxu0 0.0
      %421 = vmatprep.subr.mxu0 0.0
      %422 = vmatpush2.msra.mxu0 0.0
      %423 = vmatprep.subr.mxu0 0.0
      %424 = vmatpush2.msra.mxu0 0.0
      %425 = vmatprep.subr.mxu0 0.0
      %426 = vmatpush2.msra.mxu0 0.0
      %427 = vmatprep.subr.mxu0 0.0
      %428 = vmatpush2.msra.mxu0 0.0
      %429 = vmatprep.mubr.f32.mxu0 0.0
      %430 = vmatmul.mubr.f32.gmra.mxu0 %v363
      %v431 = vpop.f32.mrf.mxu0
      %v432 = vadd.f32 0.0, %v431
      %v433 = vpop.f32.mrf.mxu0
      %434 = vdwg.mxu0
      %s435 = scalar_lea.vmem %s202, 16
      %436 = vst.msk [vmem:[%s435] sm:$0xff] %vm280, %v432
      %v437 = vld [vmem:[%s282] sm:$0xff]
      %v438 = vld [vmem:[%s282 + $0x8] sm:$0xff]
      %439 = vmatprep.subr.mxu0 0.0
      %440 = vmatpush1.msra.mxu0 0.0
      %441 = vmatprep.subr.mxu0 0.0
      %442 = vmatpush1.msra.mxu0 0.0
      %443 = vmatprep.subr.mxu0 0.0
      %444 = vmatpush1.msra.mxu0 0.0
      %445 = vmatprep.subr.mxu0 0.0
      %446 = vmatpush1.msra.mxu0 0.0
      %447 = vmatprep.subr.mxu0 0.0
      %448 = vmatpush1.msra.mxu0 0.0
      %449 = vmatprep.subr.mxu0 0.0
      %450 = vmatpush1.msra.mxu0 0.0
      %451 = vmatprep.subr.mxu0 0.0
      %452 = vmatpush1.msra.mxu0 0.0
      %453 = vmatprep.subr.mxu0 0.0
      %454 = vmatpush1.msra.mxu0 0.0
      %455 = vmatprep.subr.mxu0 0.0
      %456 = vmatpush1.msra.mxu0 0.0
      %457 = vmatprep.subr.mxu0 0.0
      %458 = vmatpush1.msra.mxu0 0.0
      %459 = vmatprep.subr.mxu0 0.0
      %460 = vmatpush1.msra.mxu0 0.0
      %461 = vmatprep.subr.mxu0 0.0
      %462 = vmatpush1.msra.mxu0 0.0
      %463 = vmatprep.subr.mxu0 0.0
      %464 = vmatpush1.msra.mxu0 0.0
      %465 = vmatprep.subr.mxu0 0.0
      %466 = vmatpush1.msra.mxu0 0.0
      %467 = vmatprep.subr.mxu0 0.0
      %468 = vmatpush1.msra.mxu0 %v438
      %469 = vmatprep.subr.mxu0 0.0
      %470 = vmatpush1.msra.mxu0 %v437
      %471 = vmatprep.subr.mxu0 0.0
      %472 = vmatpush2.msra.mxu0 0.0
      %473 = vmatprep.subr.mxu0 0.0
      %474 = vmatpush2.msra.mxu0 0.0
      %475 = vmatprep.subr.mxu0 0.0
      %476 = vmatpush2.msra.mxu0 0.0
      %477 = vmatprep.subr.mxu0 0.0
      %478 = vmatpush2.msra.mxu0 0.0
      %479 = vmatprep.subr.mxu0 0.0
      %480 = vmatpush2.msra.mxu0 0.0
      %481 = vmatprep.subr.mxu0 0.0
      %482 = vmatpush2.msra.mxu0 0.0
      %483 = vmatprep.subr.mxu0 0.0
      %484 = vmatpush2.msra.mxu0 0.0
      %485 = vmatprep.subr.mxu0 0.0
      %486 = vmatpush2.msra.mxu0 0.0
      %487 = vmatprep.subr.mxu0 0.0
      %488 = vmatpush2.msra.mxu0 0.0
      %489 = vmatprep.subr.mxu0 0.0
      %490 = vmatpush2.msra.mxu0 0.0
      %491 = vmatprep.subr.mxu0 0.0
      %492 = vmatpush2.msra.mxu0 0.0
      %493 = vmatprep.subr.mxu0 0.0
      %494 = vmatpush2.msra.mxu0 0.0
      %495 = vmatprep.subr.mxu0 0.0
      %496 = vmatpush2.msra.mxu0 0.0
      %497 = vmatprep.subr.mxu0 0.0
      %498 = vmatpush2.msra.mxu0 0.0
      %499 = vmatprep.subr.mxu0 0.0
      %500 = vmatpush2.msra.mxu0 0.0
      %501 = vmatprep.subr.mxu0 0.0
      %502 = vmatpush2.msra.mxu0 0.0
      %503 = vmatprep.mubr.f32.mxu0 0.0
      %504 = vmatmul.mubr.f32.gmra.mxu0 %v363
      %v505 = vpop.f32.mrf.mxu0
      %v506 = vadd.f32 0.0, %v505
      %v507 = vpop.f32.mrf.mxu0
      %508 = vdwg.mxu0
      %s509 = scalar_lea.vmem %s202, 24
      %510 = vst.msk [vmem:[%s509] sm:$0xff] %vm280, %v506
      %p511 = scmp.lt.s32.totalorder %s18, 1
      %s512 = scalar_select %p511, %s18, 1
      %p513 = scmp.lt.s32.totalorder %s19, 3
      %s514 = scalar_select %p513, %s19, 3
      %p515 = scmp.lt.s32.totalorder %s20, 0
      %s516 = scalar_select %p515, %s20, 0
      %s517 = smul.addr %s514, 4
      %s518 = sadd.s32 %s516, %s517
      %s519 = smul.addr %s512, 16
      %s520 = sadd.s32 %s518, %s519
      %s521 = smul.addr %s520, 8
      %s522 = scalar_lea.vmem %s2, %s521
      // Predicated region
      $region29: #{inv_pixel_shuffle.1} parent=27 // pred_check
        %p523 = pneg %p105
      $region30: #{inv_pixel_shuffle.1} parent=27 // pred_check_branch
        %525 = sbr.rel (%p523) target = $region32
      $region31: #{inv_pixel_shuffle.1} parent=27 // pred_region
        _
      $region32: #{inv_pixel_shuffle.1} parent=27 // pred_fallthru
        _
    $region28: #{inv_pixel_shuffle.1} parent=5 // pred_fallthru
      _
    %p526 = scmp.le.s32.totalorder 2, %s8
    // Predicated region
    $region33: #{inv_pixel_shuffle.1} parent=5 // pred_check
      %p527 = pneg %p526
    $region34: #{inv_pixel_shuffle.1} parent=5 // pred_check_branch
      %529 = sbr.rel (%p527) target = $region36
    $region35: #{inv_pixel_shuffle.1} parent=5 // pred_region
      %s530 = ssub.s32 %s8, 2
      // Predicated region
      $region37: #{inv_pixel_shuffle.1} parent=35 // pred_check
        %p531 = pneg %p111
      $region38: #{inv_pixel_shuffle.1} parent=35 // pred_check_branch
        %533 = sbr.rel (%p531) target = $region40
      $region39: #{inv_pixel_shuffle.1} parent=35 // pred_region
        %p534 = scmp.lt.s32.totalorder %s21, 1
        %s535 = scalar_select %p534, %s21, 1
        %p536 = scmp.lt.s32.totalorder %s22, 3
        %s537 = scalar_select %p536, %s22, 3
        %p538 = scmp.lt.s32.totalorder %s23, 0
        %s539 = scalar_select %p538, %s23, 0
        %s540 = smul.addr %s537, 4
        %s541 = sadd.s32 %s539, %s540
        %s542 = smul.addr %s535, 16
        %s543 = sadd.s32 %s541, %s542
        %s544 = smul.addr %s543, 8
        %s545 = scalar_lea.vmem %s2, %s544
      $region40: #{inv_pixel_shuffle.1} parent=35 // pred_fallthru
        _
    $region36: #{inv_pixel_shuffle.1} parent=5 // pred_fallthru
      _
  $region6: #{inv_pixel_shuffle.1} parent=0 // loop_footer
    %s12 = sadd.s32 1, %s8
  $region7: #{inv_pixel_shuffle.1} parent=0 // loop_footer_branch
    %7 = sbr.rel target = $region3
  $region8: #{inv_pixel_shuffle.1} parent=0 // loop_exit
    _

</llo_original>
